<compile_context>
chip_gen: v6e
topology: v6e:2x2x1
jax: 0.10.0
libtpu: 0.0.40
codegen_flags: <defaults>
</compile_context>

<pallas_src>
import math
from functools import partial

import jax
import jax.numpy as jnp
from jax.experimental import pallas as pl
from jax.experimental.pallas import tpu as pltpu


# ------------------------------- helpers -------------------------------------

def _round_up(n, m):
    return (n + m - 1) // m * m


def _vmem_capacity_bytes():
    try:
        return int(pltpu.get_tpu_info().vmem_capacity_bytes)
    except Exception:
        return 64 << 20          # v7x per-core VMEM; conservative fallback


def _choose_tq(Mp, X, budget_bytes):
    """Largest multiple-of-8 query tile whose working set fits the VMEM budget.

    Per query row: ~3 live f32 (tq, Mp, X) temps + 2x double-buffered bf16 out
    => ~20 bytes per (Mp*X) element.  Fixed: resident x, K, weights, biases."""
    per_row = Mp * X * 20
    fixed = 2 * Mp * X * 4 + 2 * X * X * 4 + 2 * X * 4
    avail = max(budget_bytes - fixed, per_row * 8)
    tq = max(8, (avail // per_row) // 8 * 8)
    tq = min(tq, Mp)
    # keep >= 2 grid steps when possible so the v7x megacore ("parallel") split
    # has work for both TensorCores
    if tq >= Mp and Mp >= 16:
        tq = max(8, (Mp // 2) // 8 * 8)
    while tq > 8 and Mp % tq != 0:
        tq -= 8
    return max(8, min(tq, Mp))


# ------------------------------- kernel --------------------------------------

def _attn_kernel(x_ref, wq_ref, bq_ref, wk_ref, bk_ref, attn_ref,
                 *, scale, m_actual, tq):
    i = pl.program_id(0)
    Mp, X = x_ref.shape

    # K projection (recomputed per grid step on the otherwise-idle MXU; this
    # keeps the kernel correct under dimension_semantics=("parallel",) where a
    # program_id==0-initialized persistent scratch would be wrong on core 1).
    k = jnp.dot(x_ref[...], wk_ref[...],
                preferred_element_type=jnp.float32) + bk_ref[...]        # (Mp, X)

    # Q projection for this query-row tile only.
    row0 = pl.multiple_of(i * tq, tq)
    q = jnp.dot(x_ref[pl.ds(row0, tq), :], wq_ref[...],
                preferred_element_type=jnp.float32) + bq_ref[...]        # (tq, X)

    # Y = (Q*K)/sqrt(df).  Head split is contiguous on the last axis, so the
    # flattened (tq, Mp, X) view is identical to (tq, Mp, H, df) for the
    # elementwise product and the key-axis (dim=1) softmax.
    y = q[:, None, :] * k[None, :, :] * scale                            # (tq, Mp, X)
    if m_actual < Mp:                                                    # mask padded keys
        key_idx = jax.lax.broadcasted_iota(jnp.int32, y.shape, 1)
        y = jnp.where(key_idx < m_actual, y, -jnp.inf)

    m = jnp.max(y, axis=1, keepdims=True)
    ey = jnp.exp(y - m)                       # TODO(synk): bf16 exp on v6e/v7x
    denom = jnp.sum(ey, axis=1, keepdims=True)
    attn = ey * pl.reciprocal(denom, approx=True)     # softmax over key axis (EUP)

    # Lane-dense (tq, Mp*X) slab store; cast to output dtype (bf16) only here.
    attn_ref[...] = attn.reshape(tq, -1).astype(attn_ref.dtype)


# ------------------------------- wrappers -------------------------------------

def self_attention_pallas(params, x2d, n_head, out_dtype=jnp.bfloat16):
    """Returns attn of shape (M, M, n_head, df) (softmax over the key axis)."""
    x2d = x2d.astype(jnp.float32)
    M, X = x2d.shape
    df = X // n_head
    scale = 1.0 / math.sqrt(df)

    Mp = _round_up(M, 8)
    x_p = jnp.pad(x2d, ((0, Mp - M), (0, 0))) if Mp != M else x2d

    cap = _vmem_capacity_bytes()
    tq = _choose_tq(Mp, X, budget_bytes=cap // 2)
    grid = (Mp // tq,)

    out_bytes = jnp.dtype(out_dtype).itemsize
    cost = pl.CostEstimate(
        flops=int(2 * Mp * X * X * grid[0]      # K reprojection per step
                  + 2 * Mp * X * X              # Q projection total
                  + 2 * Mp * Mp * X),           # Q*K elementwise + softmax
        transcendentals=int(Mp * Mp * X),
        bytes_accessed=int(Mp * X * 4 + 2 * X * X * 4 + Mp * Mp * X * out_bytes),
    )

    attn_flat = pl.pallas_call(
        partial(_attn_kernel, scale=scale, m_actual=M, tq=tq),
        out_shape=jax.ShapeDtypeStruct((Mp, Mp * X), out_dtype),
        grid=grid,
        in_specs=[
            pl.BlockSpec((Mp, X), lambda i: (0, 0)),    # x (VMEM-resident, DMA'd once)
            pl.BlockSpec((X, X), lambda i: (0, 0)),     # Wq
            pl.BlockSpec((1, X), lambda i: (0, 0)),     # bq
            pl.BlockSpec((X, X), lambda i: (0, 0)),     # Wk
            pl.BlockSpec((1, X), lambda i: (0, 0)),     # bk
        ],
        out_specs=pl.BlockSpec((tq, Mp * X), lambda i: (i, 0)),
        compiler_params=pltpu.CompilerParams(
            dimension_semantics=("parallel",),
            vmem_limit_bytes=int(cap * 0.9),
        ),
        cost_estimate=cost,
    )(x_p, params["wq"], params["bq"].reshape(1, -1),
      params["wk"], params["bk"].reshape(1, -1))

    attn = attn_flat.reshape(Mp, Mp, n_head, df)
    if Mp != M:
        attn = attn[:M, :M]
    return attn


def self_attention_forward(params, x, n_head, out_dtype=jnp.bfloat16):
    """Mirrors SelfAttention.forward: returns `attn` only (weighted_V is
    discarded by the torch module, so it is not computed at all here)."""
    if x.ndim == 3:
        x = x.reshape(-1, x.shape[-1])
    return self_attention_pallas(params, x, n_head, out_dtype=out_dtype)


# --------------------------- pure-JAX reference --------------------------------

def self_attention_ref(params, x2d, n_head):
    M, X = x2d.shape
    df = X // n_head
    Q = x2d @ params["wq"] + params["bq"]
    K = x2d @ params["wk"] + params["bk"]
    Q = Q.reshape(M, n_head, df)[:, None]    # (M,1,H,df)
    K = K.reshape(M, n_head, df)[None, :]    # (1,M,H,df)
    Y = Q * K / math.sqrt(df)
    return jax.nn.softmax(Y, axis=1)


# ------------------------------- parameters ------------------------------------

def init_params(key, xdim):
    ks = jax.random.split(key, 6)
    lim = 1.0 / math.sqrt(xdim)
    u = lambda k, shape: jax.random.uniform(k, shape, jnp.float32, -lim, lim)
    return {"wq": u(ks[0], (xdim, xdim)), "bq": u(ks[1], (xdim,)),
            "wk": u(ks[2], (xdim, xdim)), "bk": u(ks[3], (xdim,)),
            "wv": u(ks[4], (xdim, xdim)), "bv": u(ks[5], (xdim,))}


# ---------------------------------- main ----------------------------------------

if __name__ == "__main__":
    cfg = {"GTN_x_hiddim": 32, "GTN_n_head": 4}
    xdim, n_head = cfg["GTN_x_hiddim"], cfg["GTN_n_head"]
    df = xdim // n_head

    root = jax.random.PRNGKey(0)
    kp, kx = jax.random.split(root)
    params = init_params(kp, xdim)

    # 3-D input path -> flattened to (16, 32)
    x = jax.random.normal(kx, (2, 8, xdim), jnp.float32)
    attn = jax.block_until_ready(self_attention_forward(params, x, n_head))

    x2d = x.reshape(-1, xdim)
    M = x2d.shape[0]
    attn_ref = self_attention_ref(params, x2d, n_head)

    assert attn.shape == (M, M, n_head, df), attn.shape
    attn_f32 = attn.astype(jnp.float32)
    assert bool(jnp.all(jnp.isfinite(attn_f32)))
    err = float(jnp.max(jnp.abs(attn_f32 - attn_ref)))
    assert err < 1e-2, err

    # Exercise the padding/masking path (M = 12, not a multiple of 8).
    x_odd = jax.random.normal(jax.random.PRNGKey(1), (12, xdim), jnp.float32)
    attn_odd = jax.block_until_ready(self_attention_forward(params, x_odd, n_head))
    ref_odd = self_attention_ref(params, x_odd, n_head)
    assert attn_odd.shape == (12, 12, n_head, df), attn_odd.shape
    err_odd = float(jnp.max(jnp.abs(attn_odd.astype(jnp.float32) - ref_odd)))
    assert err_odd < 1e-2, err_odd

    print("KERNEL_OK")
</pallas_src>

<mosaic_0001>
module attributes {stable_mosaic.version = 11 : i64} {
  func.func @_attn_kernel(%arg0: i32, %arg1: memref<16x32xf32, #tpu.memory_space<vmem>>, %arg2: memref<32x32xf32, #tpu.memory_space<vmem>>, %arg3: memref<1x32xf32, #tpu.memory_space<vmem>>, %arg4: memref<32x32xf32, #tpu.memory_space<vmem>>, %arg5: memref<1x32xf32, #tpu.memory_space<vmem>>, %arg6: memref<8x512xbf16, #tpu.memory_space<vmem>>) attributes {dimension_semantics = [#tpu.dimension_semantics<parallel>], iteration_bounds = array<i64: 2>, scalar_prefetch = 0 : i64, scratch_operands = 0 : i64, tpu.core_type = #tpu.core_type<tc>, window_params = [{pipeline_mode = #tpu.pipeline_mode<synchronous>, transform_indices = @transform_0, window_bounds = array<i64: 16, 32>}, {pipeline_mode = #tpu.pipeline_mode<synchronous>, transform_indices = @transform_1, window_bounds = array<i64: 32, 32>}, {pipeline_mode = #tpu.pipeline_mode<synchronous>, transform_indices = @transform_2, window_bounds = array<i64: 1, 32>}, {pipeline_mode = #tpu.pipeline_mode<synchronous>, transform_indices = @transform_3, window_bounds = array<i64: 32, 32>}, {pipeline_mode = #tpu.pipeline_mode<synchronous>, transform_indices = @transform_4, window_bounds = array<i64: 1, 32>}, {transform_indices = @transform_5, window_bounds = array<i64: 8, 512>}]} {
    %c0 = arith.constant 0 : index
    %c0_0 = arith.constant 0 : index
    %0 = vector.load %arg1[%c0, %c0_0] : memref<16x32xf32, #tpu.memory_space<vmem>>, vector<16x32xf32>
    %c0_1 = arith.constant 0 : index
    %c0_2 = arith.constant 0 : index
    %1 = vector.load %arg4[%c0_1, %c0_2] : memref<32x32xf32, #tpu.memory_space<vmem>>, vector<32x32xf32>
    %cst = arith.constant dense<0.000000e+00> : vector<16x32xf32>
    %2 = tpu.matmul %0, %1, %cst {dimension_numbers = #tpu.dot_dimension_numbers<[1], [0], [0], [1], [0, 0, 1, 1], [], []>} : vector<16x32xf32>, vector<32x32xf32>, vector<16x32xf32> -> vector<16x32xf32>
    %c0_3 = arith.constant 0 : index
    %c0_4 = arith.constant 0 : index
    %3 = vector.load %arg5[%c0_3, %c0_4] : memref<1x32xf32, #tpu.memory_space<vmem>>, vector<1x32xf32>
    %4 = vector.broadcast %3 : vector<1x32xf32> to vector<16x32xf32>
    %5 = arith.addf %2, %4 : vector<16x32xf32>
    %c8_i32 = arith.constant 8 : i32
    %6 = arith.muli %arg0, %c8_i32 : i32
    %7 = tpu.assume_multiple %6, 8 : i32
    %8 = arith.index_cast %7 : i32 to index
    %c0_5 = arith.constant 0 : index
    %9 = vector.load %arg1[%8, %c0_5] : memref<16x32xf32, #tpu.memory_space<vmem>>, vector<8x32xf32>
    %c0_6 = arith.constant 0 : index
    %c0_7 = arith.constant 0 : index
    %10 = vector.load %arg2[%c0_6, %c0_7] : memref<32x32xf32, #tpu.memory_space<vmem>>, vector<32x32xf32>
    %cst_8 = arith.constant dense<0.000000e+00> : vector<8x32xf32>
    %11 = tpu.matmul %9, %10, %cst_8 {dimension_numbers = #tpu.dot_dimension_numbers<[1], [0], [0], [1], [0, 0, 1, 1], [], []>} : vector<8x32xf32>, vector<32x32xf32>, vector<8x32xf32> -> vector<8x32xf32>
    %c0_9 = arith.constant 0 : index
    %c0_10 = arith.constant 0 : index
    %12 = vector.load %arg3[%c0_9, %c0_10] : memref<1x32xf32, #tpu.memory_space<vmem>>, vector<1x32xf32>
    %13 = vector.broadcast %12 : vector<1x32xf32> to vector<8x32xf32>
    %14 = arith.addf %11, %13 : vector<8x32xf32>
    %15 = vector.shape_cast %14 : vector<8x32xf32> to vector<8x1x32xf32>
    %16 = vector.shape_cast %5 : vector<16x32xf32> to vector<1x16x32xf32>
    %17 = vector.broadcast %15 : vector<8x1x32xf32> to vector<8x16x32xf32>
    %18 = vector.broadcast %16 : vector<1x16x32xf32> to vector<8x16x32xf32>
    %19 = arith.mulf %17, %18 : vector<8x16x32xf32>
    %cst_11 = arith.constant 0.353553385 : f32
    %20 = vector.broadcast %cst_11 : f32 to vector<8x16x32xf32>
    %21 = arith.mulf %19, %20 : vector<8x16x32xf32>
    %cst_12 = arith.constant dense<0xFF800000> : vector<8x32xf32>
    %22 = vector.multi_reduction <maximumf>, %21, %cst_12 [1] : vector<8x16x32xf32> to vector<8x32xf32>
    %23 = vector.shape_cast %22 : vector<8x32xf32> to vector<8x1x32xf32>
    %24 = vector.broadcast %23 : vector<8x1x32xf32> to vector<8x16x32xf32>
    %25 = arith.subf %21, %24 : vector<8x16x32xf32>
    %26 = math.exp %25 : vector<8x16x32xf32>
    %cst_13 = arith.constant dense<0.000000e+00> : vector<8x32xf32>
    %27 = vector.multi_reduction <add>, %26, %cst_13 [1] : vector<8x16x32xf32> to vector<8x32xf32>
    %28 = vector.shape_cast %27 : vector<8x32xf32> to vector<8x1x32xf32>
    %29 = tpu.reciprocal %28 {approx = true} : vector<8x1x32xf32> -> vector<8x1x32xf32>
    %30 = vector.broadcast %29 : vector<8x1x32xf32> to vector<8x16x32xf32>
    %31 = arith.mulf %26, %30 : vector<8x16x32xf32>
    %32 = vector.shape_cast %31 : vector<8x16x32xf32> to vector<8x512xf32>
    %33 = arith.truncf %32 : vector<8x512xf32> to vector<8x512xbf16>
    %c0_14 = arith.constant 0 : index
    %c0_15 = arith.constant 0 : index
    %34 = vector.load %arg6[%c0_14, %c0_15] : memref<8x512xbf16, #tpu.memory_space<vmem>>, vector<8x512xbf16>
    tpu.vector_store %arg6[%c0_14, %c0_15], %33 {strides = array<i32>} : memref<8x512xbf16, #tpu.memory_space<vmem>>, vector<8x512xbf16>,
    return
  }
  func.func @transform_0(%arg0: i32) -> (i32, i32) {
    %c0_i32 = arith.constant 0 : i32
    %c0_i32_0 = arith.constant 0 : i32
    %c0_i32_1 = arith.constant 0 : i32
    return %c0_i32, %c0_i32_0 : i32, i32
  }
  func.func @transform_1(%arg0: i32) -> (i32, i32) {
    %c0_i32 = arith.constant 0 : i32
    %c0_i32_0 = arith.constant 0 : i32
    %c0_i32_1 = arith.constant 0 : i32
    return %c0_i32, %c0_i32_0 : i32, i32
  }
  func.func @transform_2(%arg0: i32) -> (i32, i32) {
    %c0_i32 = arith.constant 0 : i32
    %c0_i32_0 = arith.constant 0 : i32
    %c0_i32_1 = arith.constant 0 : i32
    return %c0_i32, %c0_i32_0 : i32, i32
  }
  func.func @transform_3(%arg0: i32) -> (i32, i32) {
    %c0_i32 = arith.constant 0 : i32
    %c0_i32_0 = arith.constant 0 : i32
    %c0_i32_1 = arith.constant 0 : i32
    return %c0_i32, %c0_i32_0 : i32, i32
  }
  func.func @transform_4(%arg0: i32) -> (i32, i32) {
    %c0_i32 = arith.constant 0 : i32
    %c0_i32_0 = arith.constant 0 : i32
    %c0_i32_1 = arith.constant 0 : i32
    return %c0_i32, %c0_i32_0 : i32, i32
  }
  func.func @transform_5(%arg0: i32) -> (i32, i32) {
    %c0_i32 = arith.constant 0 : i32
    %c0_i32_0 = arith.constant 0 : i32
    return %arg0, %c0_i32 : i32, i32
  }
}

</mosaic_0001>

<llo_original>
// kernel: tpu_custom_call.1
$region0: #{tpu_custom_call.1}
  #allocation0 [shape = 'u32[]', space=smem, size = 0x4, offset = 0x4, fixed_abs, tag = 'smem constant byte address 0x4 - core index']
  #allocation1 [shape = 'u32[144,128]{1,0:T(1,128)}', space=vmem, size = 0x12000, scoped, tag = 'internal scratch']
  %s0 = inlined_call_operand.hbm [shape: f32[16,32], index: 0, kind: input, shape index: {}]
  %s1 = inlined_call_operand.hbm [shape: f32[32,32], index: 1, kind: input, shape index: {}]
  %s2 = inlined_call_operand.vmem [shape: f32[1,32], index: 2, kind: input, shape index: {}]
  %s3 = inlined_call_operand.hbm [shape: f32[32,32], index: 3, kind: input, shape index: {}]
  %s4 = inlined_call_operand.vmem [shape: f32[1,32], index: 4, kind: input, shape index: {}]
  %s5 = inlined_call_operand.hbm [shape: bf16[16,512], index: 5, kind: output, shape index: {}]
  %s6 = sld [smem:[#allocation0]]
  $region65: #{tpu_custom_call.1} parent=0
    _
  %s8 = ssub.s32 1, %s6
  %s9 = scalar_select 0, %s8, %s6
  $region1: #{tpu_custom_call.1} parent=0
    #allocation2 [shape = 'u8[8192]{0}', space=vmem, size = 0x2000, scoped, tag = 'input window, operand 0, single buffered']
    #allocation3 [shape = 's32[2]{0}', space=sflag, size = 0x8, scoped, tag = 'scoped memory for tpu_custom_call.1']
    #allocation4 [shape = 's32[2]{0}', space=sflag, size = 0x8, scoped, tag = 'scoped memory for tpu_custom_call.1']
    #allocation5 [shape = 'u8[16384]{0}', space=vmem, size = 0x4000, scoped, tag = 'input window, operand 1, single buffered']
    #allocation6 [shape = 's32[1]{0}', space=sflag, size = 0x4, scoped, tag = 'scoped memory for tpu_custom_call.1']
    #allocation7 [shape = 'u8[16384]{0}', space=vmem, size = 0x4000, scoped, tag = 'input window, operand 3, single buffered']
    #allocation8 [shape = 'u8[16384]{0}', space=vmem, size = 0x4000, scoped, tag = 'output window, operand 0']
    %10 = vsyncpa [#allocation3], 0
    %11 = vsyncpa [#allocation6], 0
    %12 = vsyncpa [#allocation4], 0
    %s13 = scalar_lea.sflag [#allocation4], 1
    %14 = vsyncpa %s13, 0
    loop: start=0, step=1, limit=4
    $region2: #{tpu_custom_call.1} parent=1 // loop_pre_header
      _
    $region3: #{tpu_custom_call.1} parent=1 // loop_header
      %s16 = sphi 0, %s20
      %p17 = scmp.ge.s32.totalorder %s16, 4
      %s24 = sphi 0, %s24
      %s26 = sphi 0, %s24
      %s27 = sphi 0, %s26
      %s41 = sphi 0, %s27
      %s45 = sphi 0, %s45
      %s47 = sphi 0, %s45
      %s48 = sphi 0, %s47
      %s62 = sphi 0, %s48
      %s66 = sphi 0, %s66
      %s68 = sphi 0, %s66
      %s69 = sphi 0, %s68
      %s83 = sphi 0, %s69
      %s87 = sphi 0, %s87
      %s89 = sphi 0, %s87
      %s90 = sphi 0, %s89
      %s104 = sphi 0, %s90
      %s108 = sphi 0, %s108
      %s110 = sphi 0, %s108
      %s111 = sphi 0, %s110
      %s125 = sphi 0, %s111
      %s131 = sphi 0, %s133
      %s134 = sphi 0, %s131
      %s135 = sphi 0, %s134
      %s151 = sphi 0, %s135
    $region4: #{tpu_custom_call.1} parent=1 // loop_header_branch
      %19 = sbr.rel (%p17) target = $region8
    $region5: #{tpu_custom_call.1} parent=1 // loop_body
      %s21 = ssub.s32 %s16, 1
      %s22 = ssub.s32 %s16, 2
      %s23 = sadd.s32 %s16, 1
      %s25 = sadd.s32 %s24, 1
      %p28 = scmp.eq.s32.totalorder %s16, 1
      %p29 = scmp.ne.s32.totalorder %s24, %s26
      %p30 = scmp.eq.s32.totalorder %s16, 0
      %p31 = por %p29, %p30
      %p32 = scmp.ne.s32.totalorder %s24, %s26
      %p33 = scmp.eq.s32.totalorder %s21, 1
      %p34 = por %p32, %p33
      %p35 = scmp.ne.s32.totalorder %s26, %s27
      %p36 = scmp.eq.s32.totalorder %s21, 0
      %p37 = por %p35, %p36
      %p38 = scmp.ne.s32.totalorder %s26, %s27
      %p39 = scmp.eq.s32.totalorder %s22, 1
      %p40 = por %p38, %p39
      %p42 = scmp.ne.s32.totalorder %s27, %s41
      %p43 = scmp.eq.s32.totalorder %s22, 0
      %p44 = por %p42, %p43
      %s46 = sadd.s32 %s45, 1
      %p49 = scmp.eq.s32.totalorder %s16, 1
      %p50 = scmp.ne.s32.totalorder %s45, %s47
      %p51 = scmp.eq.s32.totalorder %s16, 0
      %p52 = por %p50, %p51
      %p53 = scmp.ne.s32.totalorder %s45, %s47
      %p54 = scmp.eq.s32.totalorder %s21, 1
      %p55 = por %p53, %p54
      %p56 = scmp.ne.s32.totalorder %s47, %s48
      %p57 = scmp.eq.s32.totalorder %s21, 0
      %p58 = por %p56, %p57
      %p59 = scmp.ne.s32.totalorder %s47, %s48
      %p60 = scmp.eq.s32.totalorder %s22, 1
      %p61 = por %p59, %p60
      %p63 = scmp.ne.s32.totalorder %s48, %s62
      %p64 = scmp.eq.s32.totalorder %s22, 0
      %p65 = por %p63, %p64
      %s67 = sadd.s32 %s66, 1
      %p70 = scmp.eq.s32.totalorder %s16, 1
      %p71 = scmp.ne.s32.totalorder %s66, %s68
      %p72 = scmp.eq.s32.totalorder %s16, 0
      %p73 = por %p71, %p72
      %p74 = scmp.ne.s32.totalorder %s66, %s68
      %p75 = scmp.eq.s32.totalorder %s21, 1
      %p76 = por %p74, %p75
      %p77 = scmp.ne.s32.totalorder %s68, %s69
      %p78 = scmp.eq.s32.totalorder %s21, 0
      %p79 = por %p77, %p78
      %p80 = scmp.ne.s32.totalorder %s68, %s69
      %p81 = scmp.eq.s32.totalorder %s22, 1
      %p82 = por %p80, %p81
      %p84 = scmp.ne.s32.totalorder %s69, %s83
      %p85 = scmp.eq.s32.totalorder %s22, 0
      %p86 = por %p84, %p85
      %s88 = sadd.s32 %s87, 1
      %p91 = scmp.eq.s32.totalorder %s16, 1
      %p92 = scmp.ne.s32.totalorder %s87, %s89
      %p93 = scmp.eq.s32.totalorder %s16, 0
      %p94 = por %p92, %p93
      %p95 = scmp.ne.s32.totalorder %s87, %s89
      %p96 = scmp.eq.s32.totalorder %s21, 1
      %p97 = por %p95, %p96
      %p98 = scmp.ne.s32.totalorder %s89, %s90
      %p99 = scmp.eq.s32.totalorder %s21, 0
      %p100 = por %p98, %p99
      %p101 = scmp.ne.s32.totalorder %s89, %s90
      %p102 = scmp.eq.s32.totalorder %s22, 1
      %p103 = por %p101, %p102
      %p105 = scmp.ne.s32.totalorder %s90, %s104
      %p106 = scmp.eq.s32.totalorder %s22, 0
      %p107 = por %p105, %p106
      %s109 = sadd.s32 %s108, 1
      %p112 = scmp.eq.s32.totalorder %s16, 1
      %p113 = scmp.ne.s32.totalorder %s108, %s110
      %p114 = scmp.eq.s32.totalorder %s16, 0
      %p115 = por %p113, %p114
      %p116 = scmp.ne.s32.totalorder %s108, %s110
      %p117 = scmp.eq.s32.totalorder %s21, 1
      %p118 = por %p116, %p117
      %p119 = scmp.ne.s32.totalorder %s110, %s111
      %p120 = scmp.eq.s32.totalorder %s21, 0
      %p121 = por %p119, %p120
      %p122 = scmp.ne.s32.totalorder %s110, %s111
      %p123 = scmp.eq.s32.totalorder %s22, 1
      %p124 = por %p122, %p123
      %p126 = scmp.ne.s32.totalorder %s111, %s125
      %p127 = scmp.eq.s32.totalorder %s22, 0
      %p128 = por %p126, %p127
      %s129 = ssub.s32 %s16, %s23
      %p130 = scmp.eq.s32.totalorder %s129, 0
      %s132 = sadd.s32 %s131, 1
      %s133 = scalar_select %p130, %s131, %s132
      %p136 = pneg %p130
      %p137 = scmp.eq.s32.totalorder %s16, 1
      %p138 = por %p136, %p137
      %p139 = scmp.ne.s32.totalorder %s131, %s134
      %p140 = scmp.eq.s32.totalorder %s16, 0
      %p141 = por %p139, %p140
      %p142 = scmp.ne.s32.totalorder %s131, %s134
      %p143 = scmp.eq.s32.totalorder %s21, 1
      %p144 = por %p142, %p143
      %p145 = scmp.ne.s32.totalorder %s134, %s135
      %p146 = scmp.eq.s32.totalorder %s21, 0
      %p147 = por %p145, %p146
      %p148 = scmp.ne.s32.totalorder %s134, %s135
      %p149 = scmp.eq.s32.totalorder %s22, 1
      %p150 = por %p148, %p149
      %p152 = scmp.ne.s32.totalorder %s135, %s151
      %p153 = scmp.eq.s32.totalorder %s22, 0
      %p154 = por %p152, %p153
      %p155 = scmp.le.s32.totalorder 1, %s16
      %p156 = scmp.lt.s32.totalorder %s16, 3
      %p157 = pnand %p155, %p156
      %p158 = pneg %p157
      // Predicated region
      $region9: #{tpu_custom_call.1} parent=5 // pred_check
        _
      $region10: #{tpu_custom_call.1} parent=5 // pred_check_branch
        %160 = sbr.rel (%p157) target = $region12
      $region11: #{tpu_custom_call.1} parent=5 // pred_region
        %s161 = ssub.s32 %s16, 1
        // Predicated region
        $region13: #{tpu_custom_call.1} parent=11 // pred_check
          %p162 = pneg %p37
        $region14: #{tpu_custom_call.1} parent=11 // pred_check_branch
          %164 = sbr.rel (%p162) target = $region16
        $region15: #{tpu_custom_call.1} parent=11 // pred_region
          %s166 = ssub.s32 256, 256
          %167 = vsyncadd [#allocation3], %s166
          %s168 = sshll.u32 [#allocation2], 4
          %s169 = int_to_ptr.vmem [resolvable:$true] %s168
          %174 = dma.hbm_to_vmem [thread:$0]  %s0, 256, %s169, [#allocation3], 128, 128, 8
        $region16: #{tpu_custom_call.1} parent=11 // pred_fallthru
          _
        // Predicated region
        $region17: #{tpu_custom_call.1} parent=11 // pred_check
          %p175 = pneg %p58
        $region18: #{tpu_custom_call.1} parent=11 // pred_check_branch
          %177 = sbr.rel (%p175) target = $region20
        $region19: #{tpu_custom_call.1} parent=11 // pred_region
          %s179 = ssub.s32 512, 512
          %180 = vsyncadd [#allocation6], %s179
          %s181 = sshll.u32 [#allocation5], 4
          %s182 = int_to_ptr.vmem [resolvable:$true] %s181
          %187 = dma.hbm_to_vmem [thread:$0]  %s1, 512, %s182, [#allocation6], 128, 128, 8
        $region20: #{tpu_custom_call.1} parent=11 // pred_fallthru
          _
        // Predicated region
        $region21: #{tpu_custom_call.1} parent=11 // pred_check
          %p188 = pneg %p79
        $region22: #{tpu_custom_call.1} parent=11 // pred_check_branch
          %190 = sbr.rel (%p188) target = $region24
        $region23: #{tpu_custom_call.1} parent=11 // pred_region
          _
        $region24: #{tpu_custom_call.1} parent=11 // pred_fallthru
          _
        // Predicated region
        $region25: #{tpu_custom_call.1} parent=11 // pred_check
          %p191 = pneg %p100
        $region26: #{tpu_custom_call.1} parent=11 // pred_check_branch
          %193 = sbr.rel (%p191) target = $region28
        $region27: #{tpu_custom_call.1} parent=11 // pred_region
          %s195 = ssub.s32 512, 512
          %196 = vsyncadd [#allocation6], %s195
          %s197 = sshll.u32 [#allocation7], 4
          %s198 = int_to_ptr.vmem [resolvable:$true] %s197
          %203 = dma.hbm_to_vmem [thread:$0]  %s3, 512, %s198, [#allocation6], 128, 128, 8
        $region28: #{tpu_custom_call.1} parent=11 // pred_fallthru
          _
        // Predicated region
        $region29: #{tpu_custom_call.1} parent=11 // pred_check
          %p204 = pneg %p121
        $region30: #{tpu_custom_call.1} parent=11 // pred_check_branch
          %206 = sbr.rel (%p204) target = $region32
        $region31: #{tpu_custom_call.1} parent=11 // pred_region
          _
        $region32: #{tpu_custom_call.1} parent=11 // pred_fallthru
          _
      $region12: #{tpu_custom_call.1} parent=5 // pred_fallthru
        _
      %p207 = scmp.lt.s32.totalorder %s16, 2
      // Predicated region
      $region33: #{tpu_custom_call.1} parent=5 // pred_check
        %p208 = pneg %p207
      $region34: #{tpu_custom_call.1} parent=5 // pred_check_branch
        %210 = sbr.rel (%p208) target = $region36
      $region35: #{tpu_custom_call.1} parent=5 // pred_region
        _
      $region36: #{tpu_custom_call.1} parent=5 // pred_fallthru
        _
      %p211 = scmp.le.s32.totalorder 1, %s16
      %p212 = scmp.lt.s32.totalorder %s16, 3
      %p213 = pnand %p211, %p212
      %p214 = pneg %p213
      // Predicated region
      $region37: #{tpu_custom_call.1} parent=5 // pred_check
        _
      $region38: #{tpu_custom_call.1} parent=5 // pred_check_branch
        %216 = sbr.rel (%p213) target = $region40
      $region39: #{tpu_custom_call.1} parent=5 // pred_region
        %s217 = ssub.s32 %s16, 1
        // Predicated region
        $region41: #{tpu_custom_call.1} parent=39 // pred_check
          %p218 = pneg %p37
        $region42: #{tpu_custom_call.1} parent=39 // pred_check_branch
          %220 = sbr.rel (%p218) target = $region44
        $region43: #{tpu_custom_call.1} parent=39 // pred_region
          %221 = dma.done [#allocation3], 256
        $region44: #{tpu_custom_call.1} parent=39 // pred_fallthru
          _
        // Predicated region
        $region45: #{tpu_custom_call.1} parent=39 // pred_check
          %p222 = pneg %p58
        $region46: #{tpu_custom_call.1} parent=39 // pred_check_branch
          %224 = sbr.rel (%p222) target = $region48
        $region47: #{tpu_custom_call.1} parent=39 // pred_region
          %225 = dma.done [#allocation6], 512
        $region48: #{tpu_custom_call.1} parent=39 // pred_fallthru
          _
        // Predicated region
        $region49: #{tpu_custom_call.1} parent=39 // pred_check
          %p226 = pneg %p100
        $region50: #{tpu_custom_call.1} parent=39 // pred_check_branch
          %228 = sbr.rel (%p226) target = $region52
        $region51: #{tpu_custom_call.1} parent=39 // pred_region
          %229 = dma.done [#allocation6], 512
        $region52: #{tpu_custom_call.1} parent=39 // pred_fallthru
          _
        %p230 = pneg %p37
        %p231 = pneg %p34
        %p232 = pneg %p58
        %p233 = pneg %p55
        %p234 = pneg %p79
        %p235 = pneg %p76
        %p236 = pneg %p100
        %p237 = pneg %p97
        %p238 = pneg %p121
        %p239 = pneg %p118
        %p240 = pneg %p147
        %p241 = pneg %p144
        %s242 = sand.u32 %s134, 1
        %s243 = scalar_lea.sflag [#allocation4], %s242
        %s244 = sand.u32 %s134, 1
        %s245 = smul.addr %s244, 16
        %s246 = scalar_lea.vmem [#allocation8], %s245
        %v247 = vld [vmem:[#allocation2] sm:$0xff]
        %v248 = vld [vmem:[#allocation2 + $0x8] sm:$0xff]
        %v249 = vld [vmem:[#allocation7] sm:$0xff]
        %v250 = vld [vmem:[#allocation7 + $0x8] sm:$0xff]
        %v251 = vld [vmem:[#allocation7 + $0x10] sm:$0xff]
        %v252 = vld [vmem:[#allocation7 + $0x18] sm:$0xff]
        %v253 = vld [vmem:[%s4] sm:$0x1]
        %v255 = vlaneseq
        %v256 = vshrl.u32 %v255, 7
        %v257 = vsub.s32 0, %v256
        %v258 = vrot.slane %v253, %v257
        %vm260 = vcmask 261120
        %v262 = vsel %vm260, %v247, 0
        %v265 = vsel %vm260, %v248, 0
        %267 = vmatprep.subr.mxu0 0.0
        %268 = vmatpush1.msra.mxu0 0.0
        %269 = vmatprep.subr.mxu0 0.0
        %270 = vmatpush1.msra.mxu0 0.0
        %271 = vmatprep.subr.mxu0 0.0
        %272 = vmatpush1.msra.mxu0 0.0
        %273 = vmatprep.subr.mxu0 0.0
        %274 = vmatpush1.msra.mxu0 0.0
        %275 = vmatprep.subr.mxu0 0.0
        %276 = vmatpush1.msra.mxu0 0.0
        %277 = vmatprep.subr.mxu0 0.0
        %278 = vmatpush1.msra.mxu0 0.0
        %279 = vmatprep.subr.mxu0 0.0
        %280 = vmatpush1.msra.mxu0 0.0
        %281 = vmatprep.subr.mxu0 0.0
        %282 = vmatpush1.msra.mxu0 0.0
        %283 = vmatprep.subr.mxu0 0.0
        %284 = vmatpush1.msra.mxu0 0.0
        %285 = vmatprep.subr.mxu0 0.0
        %286 = vmatpush1.msra.mxu0 0.0
        %287 = vmatprep.subr.mxu0 0.0
        %288 = vmatpush1.msra.mxu0 0.0
        %289 = vmatprep.subr.mxu0 0.0
        %290 = vmatpush1.msra.mxu0 0.0
        %291 = vmatprep.subr.mxu0 0.0
        %292 = vmatpush1.msra.mxu0 %v252
        %293 = vmatprep.subr.mxu0 0.0
        %294 = vmatpush1.msra.mxu0 %v251
        %295 = vmatprep.subr.mxu0 0.0
        %296 = vmatpush1.msra.mxu0 %v250
        %297 = vmatprep.subr.mxu0 0.0
        %298 = vmatpush1.msra.mxu0 %v249
        %299 = vmatprep.subr.mxu0 0.0
        %300 = vmatpush2.msra.mxu0 0.0
        %301 = vmatprep.subr.mxu0 0.0
        %302 = vmatpush2.msra.mxu0 0.0
        %303 = vmatprep.subr.mxu0 0.0
        %304 = vmatpush2.msra.mxu0 0.0
        %305 = vmatprep.subr.mxu0 0.0
        %306 = vmatpush2.msra.mxu0 0.0
        %307 = vmatprep.subr.mxu0 0.0
        %308 = vmatpush2.msra.mxu0 0.0
        %309 = vmatprep.subr.mxu0 0.0
        %310 = vmatpush2.msra.mxu0 0.0
        %311 = vmatprep.subr.mxu0 0.0
        %312 = vmatpush2.msra.mxu0 0.0
        %313 = vmatprep.subr.mxu0 0.0
        %314 = vmatpush2.msra.mxu0 0.0
        %315 = vmatprep.subr.mxu0 0.0
        %316 = vmatpush2.msra.mxu0 0.0
        %317 = vmatprep.subr.mxu0 0.0
        %318 = vmatpush2.msra.mxu0 0.0
        %319 = vmatprep.subr.mxu0 0.0
        %320 = vmatpush2.msra.mxu0 0.0
        %321 = vmatprep.subr.mxu0 0.0
        %322 = vmatpush2.msra.mxu0 0.0
        %323 = vmatprep.subr.mxu0 0.0
        %324 = vmatpush2.msra.mxu0 0.0
        %325 = vmatprep.subr.mxu0 0.0
        %326 = vmatpush2.msra.mxu0 0.0
        %327 = vmatprep.subr.mxu0 0.0
        %328 = vmatpush2.msra.mxu0 0.0
        %329 = vmatprep.subr.mxu0 0.0
        %330 = vmatpush2.msra.mxu0 0.0
        %331 = vmatprep.mubr.f32.mxu0 0.0
        %332 = vmatmul.mubr.f32.gmra.mxu0 %v262
        %v333 = vpop.f32.mrf.mxu0
        %v334 = vadd.f32 %v258, %v333
        %v335 = vpop.f32.mrf.mxu0
        %336 = vmatprep.mubr.f32.mxu0 0.0
        %337 = vmatmul.mubr.f32.gmra.mxu0 %v265
        %v338 = vpop.f32.mrf.mxu0
        %v339 = vadd.f32 %v258, %v338
        %v340 = vpop.f32.mrf.mxu0
        %341 = vdwg.mxu0
        %s342 = smul.u32 %s21, 8
        %s343 = scalar_lea.vmem [#allocation2], %s342
        %v344 = vld [vmem:[%s343] sm:$0xff]
        %v345 = vld [vmem:[#allocation5] sm:$0xff]
        %v346 = vld [vmem:[#allocation5 + $0x8] sm:$0xff]
        %v347 = vld [vmem:[#allocation5 + $0x10] sm:$0xff]
        %v348 = vld [vmem:[#allocation5 + $0x18] sm:$0xff]
        %v349 = vld [vmem:[%s2] sm:$0x1]
        %v351 = vlaneseq
        %v352 = vshrl.u32 %v351, 7
        %v353 = vsub.s32 0, %v352
        %v354 = vrot.slane %v349, %v353
        %v357 = vsel %vm260, %v344, 0
        %359 = vmatprep.subr.mxu0 0.0
        %360 = vmatpush1.msra.mxu0 0.0
        %361 = vmatprep.subr.mxu0 0.0
        %362 = vmatpush1.msra.mxu0 0.0
        %363 = vmatprep.subr.mxu0 0.0
        %364 = vmatpush1.msra.mxu0 0.0
        %365 = vmatprep.subr.mxu0 0.0
        %366 = vmatpush1.msra.mxu0 0.0
        %367 = vmatprep.subr.mxu0 0.0
        %368 = vmatpush1.msra.mxu0 0.0
        %369 = vmatprep.subr.mxu0 0.0
        %370 = vmatpush1.msra.mxu0 0.0
        %371 = vmatprep.subr.mxu0 0.0
        %372 = vmatpush1.msra.mxu0 0.0
        %373 = vmatprep.subr.mxu0 0.0
        %374 = vmatpush1.msra.mxu0 0.0
        %375 = vmatprep.subr.mxu0 0.0
        %376 = vmatpush1.msra.mxu0 0.0
        %377 = vmatprep.subr.mxu0 0.0
        %378 = vmatpush1.msra.mxu0 0.0
        %379 = vmatprep.subr.mxu0 0.0
        %380 = vmatpush1.msra.mxu0 0.0
        %381 = vmatprep.subr.mxu0 0.0
        %382 = vmatpush1.msra.mxu0 0.0
        %383 = vmatprep.subr.mxu0 0.0
        %384 = vmatpush1.msra.mxu0 %v348
        %385 = vmatprep.subr.mxu0 0.0
        %386 = vmatpush1.msra.mxu0 %v347
        %387 = vmatprep.subr.mxu0 0.0
        %388 = vmatpush1.msra.mxu0 %v346
        %389 = vmatprep.subr.mxu0 0.0
        %390 = vmatpush1.msra.mxu0 %v345
        %391 = vmatprep.subr.mxu0 0.0
        %392 = vmatpush2.msra.mxu0 0.0
        %393 = vmatprep.subr.mxu0 0.0
        %394 = vmatpush2.msra.mxu0 0.0
        %395 = vmatprep.subr.mxu0 0.0
        %396 = vmatpush2.msra.mxu0 0.0
        %397 = vmatprep.subr.mxu0 0.0
        %398 = vmatpush2.msra.mxu0 0.0
        %399 = vmatprep.subr.mxu0 0.0
        %400 = vmatpush2.msra.mxu0 0.0
        %401 = vmatprep.subr.mxu0 0.0
        %402 = vmatpush2.msra.mxu0 0.0
        %403 = vmatprep.subr.mxu0 0.0
        %404 = vmatpush2.msra.mxu0 0.0
        %405 = vmatprep.subr.mxu0 0.0
        %406 = vmatpush2.msra.mxu0 0.0
        %407 = vmatprep.subr.mxu0 0.0
        %408 = vmatpush2.msra.mxu0 0.0
        %409 = vmatprep.subr.mxu0 0.0
        %410 = vmatpush2.msra.mxu0 0.0
        %411 = vmatprep.subr.mxu0 0.0
        %412 = vmatpush2.msra.mxu0 0.0
        %413 = vmatprep.subr.mxu0 0.0
        %414 = vmatpush2.msra.mxu0 0.0
        %415 = vmatprep.subr.mxu0 0.0
        %416 = vmatpush2.msra.mxu0 0.0
        %417 = vmatprep.subr.mxu0 0.0
        %418 = vmatpush2.msra.mxu0 0.0
        %419 = vmatprep.subr.mxu0 0.0
        %420 = vmatpush2.msra.mxu0 0.0
        %421 = vmatprep.subr.mxu0 0.0
        %422 = vmatpush2.msra.mxu0 0.0
        %423 = vmatprep.mubr.f32.mxu0 0.0
        %424 = vmatmul.mubr.f32.gmra.mxu0 %v357
        %v425 = vpop.f32.mrf.mxu0
        %v426 = vadd.f32 %v354, %v425
        %v427 = vpop.f32.mrf.mxu0
        %428 = vdwg.mxu0
        %v430 = vcombine.high %v426, %v426
        %v432 = vunpack.c.l.s4 1966171168
        %v433 = vunpack.c.0.s8 %v432
        %v434 = vlaneseq
        %v435 = vshrl.u32 %v434, 7
        %v436 = vsub.s32 %v433, %v435
        %v437 = vrot.slane %v426, %v436
        %v439 = vunpack.c.l.s4 1966171168
        %v440 = vunpack.c.0.s8 %v439
        %v441 = vlaneseq
        %v442 = vshrl.u32 %v441, 7
        %v443 = vsub.s32 %v440, %v442
        %v444 = vrot.slane %v430, %v443
        %v445 = vcombine.high %v437, %v437
        %v446 = vcombine.high %v444, %v444
        %v448 = vunpack.c.l.s4 1966171168
        %v449 = vunpack.c.0.s8 %v448
        %v450 = vlaneseq
        %v451 = vshrl.u32 %v450, 7
        %v452 = vsub.s32 %v449, %v451
        %v453 = vrot.slane %v437, %v452
        %v455 = vunpack.c.l.s4 1966171168
        %v456 = vunpack.c.0.s8 %v455
        %v457 = vlaneseq
        %v458 = vshrl.u32 %v457, 7
        %v459 = vsub.s32 %v456, %v458
        %v460 = vrot.slane %v444, %v459
        %v462 = vunpack.c.l.s4 1966171168
        %v463 = vunpack.c.0.s8 %v462
        %v464 = vlaneseq
        %v465 = vshrl.u32 %v464, 7
        %v466 = vsub.s32 %v463, %v465
        %v467 = vrot.slane %v445, %v466
        %v469 = vunpack.c.l.s4 1966171168
        %v470 = vunpack.c.0.s8 %v469
        %v471 = vlaneseq
        %v472 = vshrl.u32 %v471, 7
        %v473 = vsub.s32 %v470, %v472
        %v474 = vrot.slane %v446, %v473
        %v475 = vcombine.high %v453, %v453
        %v476 = vcombine.high %v460, %v460
        %v477 = vcombine.high %v467, %v467
        %v478 = vcombine.high %v474, %v474
        %v479 = vlaneseq
        %v480 = vshrl.u32 %v479, 7
        %v481 = vsub.s32 0, %v480
        %v482 = vrot.slane %v453, %v481
        %v483 = vlaneseq
        %v484 = vshrl.u32 %v483, 7
        %v485 = vsub.s32 0, %v484
        %v486 = vrot.slane %v467, %v485
        %v487 = vlaneseq
        %v488 = vshrl.u32 %v487, 7
        %v489 = vsub.s32 0, %v488
        %v490 = vrot.slane %v475, %v489
        %v491 = vlaneseq
        %v492 = vshrl.u32 %v491, 7
        %v493 = vsub.s32 0, %v492
        %v494 = vrot.slane %v477, %v493
        %v495 = vlaneseq
        %v496 = vshrl.u32 %v495, 7
        %v497 = vsub.s32 0, %v496
        %v498 = vrot.slane %v460, %v497
        %v499 = vlaneseq
        %v500 = vshrl.u32 %v499, 7
        %v501 = vsub.s32 0, %v500
        %v502 = vrot.slane %v474, %v501
        %v503 = vlaneseq
        %v504 = vshrl.u32 %v503, 7
        %v505 = vsub.s32 0, %v504
        %v506 = vrot.slane %v476, %v505
        %v507 = vlaneseq
        %v508 = vshrl.u32 %v507, 7
        %v509 = vsub.s32 0, %v508
        %v510 = vrot.slane %v478, %v509
        %v519 = vmul.f32 %v482, %v334
        %v520 = vmul.f32 %v482, %v339
        %v521 = vmul.f32 %v486, %v334
        %v522 = vmul.f32 %v486, %v339
        %v523 = vmul.f32 %v490, %v334
        %v524 = vmul.f32 %v490, %v339
        %v525 = vmul.f32 %v494, %v334
        %v526 = vmul.f32 %v494, %v339
        %v527 = vmul.f32 %v498, %v334
        %v528 = vmul.f32 %v498, %v339
        %v529 = vmul.f32 %v502, %v334
        %v530 = vmul.f32 %v502, %v339
        %v531 = vmul.f32 %v506, %v334
        %v532 = vmul.f32 %v506, %v339
        %v533 = vmul.f32 %v510, %v334
        %v534 = vmul.f32 %v510, %v339
        %v535 = vmul.f32 %v519, 0.35355338
        %v536 = vmul.f32 %v520, 0.35355338
        %v537 = vmul.f32 %v521, 0.35355338
        %v538 = vmul.f32 %v522, 0.35355338
        %v539 = vmul.f32 %v523, 0.35355338
        %v540 = vmul.f32 %v524, 0.35355338
        %v541 = vmul.f32 %v525, 0.35355338
        %v542 = vmul.f32 %v526, 0.35355338
        %v543 = vmul.f32 %v527, 0.35355338
        %v544 = vmul.f32 %v528, 0.35355338
        %v545 = vmul.f32 %v529, 0.35355338
        %v546 = vmul.f32 %v530, 0.35355338
        %v547 = vmul.f32 %v531, 0.35355338
        %v548 = vmul.f32 %v532, 0.35355338
        %v549 = vmul.f32 %v533, 0.35355338
        %v550 = vmul.f32 %v534, 0.35355338
        %v551 = vsel %vm260, %v535, -inf
        %v552 = vsel %vm260, %v536, -inf
        %v553 = vmax.f32 %v551, %v552
        %v554 = vrot.slane %v553, 4
        %v555 = vmax.f32 %v553, %v554
        %v556 = vrot.slane %v555, 2
        %v557 = vmax.f32 %v555, %v556
        %v558 = vrot.slane %v557, 1
        %v559 = vmax.f32 %v557, %v558
        %v560 = vsel %vm260, %v537, -inf
        %v561 = vsel %vm260, %v538, -inf
        %v562 = vmax.f32 %v560, %v561
        %v563 = vrot.slane %v562, 4
        %v564 = vmax.f32 %v562, %v563
        %v565 = vrot.slane %v564, 2
        %v566 = vmax.f32 %v564, %v565
        %v567 = vrot.slane %v566, 1
        %v568 = vmax.f32 %v566, %v567
        %v569 = vsel %vm260, %v539, -inf
        %v570 = vsel %vm260, %v540, -inf
        %v571 = vmax.f32 %v569, %v570
        %v572 = vrot.slane %v571, 4
        %v573 = vmax.f32 %v571, %v572
        %v574 = vrot.slane %v573, 2
        %v575 = vmax.f32 %v573, %v574
        %v576 = vrot.slane %v575, 1
        %v577 = vmax.f32 %v575, %v576
        %v578 = vsel %vm260, %v541, -inf
        %v579 = vsel %vm260, %v542, -inf
        %v580 = vmax.f32 %v578, %v579
        %v581 = vrot.slane %v580, 4
        %v582 = vmax.f32 %v580, %v581
        %v583 = vrot.slane %v582, 2
        %v584 = vmax.f32 %v582, %v583
        %v585 = vrot.slane %v584, 1
        %v586 = vmax.f32 %v584, %v585
        %v587 = vsel %vm260, %v543, -inf
        %v588 = vsel %vm260, %v544, -inf
        %v589 = vmax.f32 %v587, %v588
        %v590 = vrot.slane %v589, 4
        %v591 = vmax.f32 %v589, %v590
        %v592 = vrot.slane %v591, 2
        %v593 = vmax.f32 %v591, %v592
        %v594 = vrot.slane %v593, 1
        %v595 = vmax.f32 %v593, %v594
        %v596 = vsel %vm260, %v545, -inf
        %v597 = vsel %vm260, %v546, -inf
        %v598 = vmax.f32 %v596, %v597
        %v599 = vrot.slane %v598, 4
        %v600 = vmax.f32 %v598, %v599
        %v601 = vrot.slane %v600, 2
        %v602 = vmax.f32 %v600, %v601
        %v603 = vrot.slane %v602, 1
        %v604 = vmax.f32 %v602, %v603
        %v605 = vsel %vm260, %v547, -inf
        %v606 = vsel %vm260, %v548, -inf
        %v607 = vmax.f32 %v605, %v606
        %v608 = vrot.slane %v607, 4
        %v609 = vmax.f32 %v607, %v608
        %v610 = vrot.slane %v609, 2
        %v611 = vmax.f32 %v609, %v610
        %v612 = vrot.slane %v611, 1
        %v613 = vmax.f32 %v611, %v612
        %v614 = vsel %vm260, %v549, -inf
        %v615 = vsel %vm260, %v550, -inf
        %v616 = vmax.f32 %v614, %v615
        %v617 = vrot.slane %v616, 4
        %v618 = vmax.f32 %v616, %v617
        %v619 = vrot.slane %v618, 2
        %v620 = vmax.f32 %v618, %v619
        %v621 = vrot.slane %v620, 1
        %v622 = vmax.f32 %v620, %v621
        %v623 = vsub.f32 %v535, %v559
        %v624 = vsub.f32 %v536, %v559
        %v625 = vsub.f32 %v537, %v568
        %v626 = vsub.f32 %v538, %v568
        %v627 = vsub.f32 %v539, %v577
        %v628 = vsub.f32 %v540, %v577
        %v629 = vsub.f32 %v541, %v586
        %v630 = vsub.f32 %v542, %v586
        %v631 = vsub.f32 %v543, %v595
        %v632 = vsub.f32 %v544, %v595
        %v633 = vsub.f32 %v545, %v604
        %v634 = vsub.f32 %v546, %v604
        %v635 = vsub.f32 %v547, %v613
        %v636 = vsub.f32 %v548, %v613
        %v637 = vsub.f32 %v549, %v622
        %v638 = vsub.f32 %v550, %v622
        %v639 = vmul.f32 %v623, 1.442695
        %v640 = vpow.pop %v639
        %v641 = vmul.f32 %v624, 1.442695
        %v642 = vpow.pop %v641
        %v643 = vmul.f32 %v625, 1.442695
        %v644 = vpow.pop %v643
        %v645 = vmul.f32 %v626, 1.442695
        %v646 = vpow.pop %v645
        %v647 = vmul.f32 %v627, 1.442695
        %v648 = vpow.pop %v647
        %v649 = vmul.f32 %v628, 1.442695
        %v650 = vpow.pop %v649
        %v651 = vmul.f32 %v629, 1.442695
        %v652 = vpow.pop %v651
        %v653 = vmul.f32 %v630, 1.442695
        %v654 = vpow.pop %v653
        %v655 = vmul.f32 %v631, 1.442695
        %v656 = vpow.pop %v655
        %v657 = vmul.f32 %v632, 1.442695
        %v658 = vpow.pop %v657
        %v659 = vmul.f32 %v633, 1.442695
        %v660 = vpow.pop %v659
        %v661 = vmul.f32 %v634, 1.442695
        %v662 = vpow.pop %v661
        %v663 = vmul.f32 %v635, 1.442695
        %v664 = vpow.pop %v663
        %v665 = vmul.f32 %v636, 1.442695
        %v666 = vpow.pop %v665
        %v667 = vmul.f32 %v637, 1.442695
        %v668 = vpow.pop %v667
        %v669 = vmul.f32 %v638, 1.442695
        %v670 = vpow.pop %v669
        %v671 = vsel %vm260, %v640, 0.0
        %v672 = vsel %vm260, %v642, 0.0
        %v673 = vadd.f32 %v671, %v672
        %v674 = vrot.slane %v673, 4
        %v675 = vadd.f32 %v673, %v674
        %v676 = vrot.slane %v675, 2
        %v677 = vadd.f32 %v675, %v676
        %v678 = vrot.slane %v677, 1
        %v679 = vadd.f32 %v677, %v678
        %v680 = vsel %vm260, %v644, 0.0
        %v681 = vsel %vm260, %v646, 0.0
        %v682 = vadd.f32 %v680, %v681
        %v683 = vrot.slane %v682, 4
        %v684 = vadd.f32 %v682, %v683
        %v685 = vrot.slane %v684, 2
        %v686 = vadd.f32 %v684, %v685
        %v687 = vrot.slane %v686, 1
        %v688 = vadd.f32 %v686, %v687
        %v689 = vsel %vm260, %v648, 0.0
        %v690 = vsel %vm260, %v650, 0.0
        %v691 = vadd.f32 %v689, %v690
        %v692 = vrot.slane %v691, 4
        %v693 = vadd.f32 %v691, %v692
        %v694 = vrot.slane %v693, 2
        %v695 = vadd.f32 %v693, %v694
        %v696 = vrot.slane %v695, 1
        %v697 = vadd.f32 %v695, %v696
        %v698 = vsel %vm260, %v652, 0.0
        %v699 = vsel %vm260, %v654, 0.0
        %v700 = vadd.f32 %v698, %v699
        %v701 = vrot.slane %v700, 4
        %v702 = vadd.f32 %v700, %v701
        %v703 = vrot.slane %v702, 2
        %v704 = vadd.f32 %v702, %v703
        %v705 = vrot.slane %v704, 1
        %v706 = vadd.f32 %v704, %v705
        %v707 = vsel %vm260, %v656, 0.0
        %v708 = vsel %vm260, %v658, 0.0
        %v709 = vadd.f32 %v707, %v708
        %v710 = vrot.slane %v709, 4
        %v711 = vadd.f32 %v709, %v710
        %v712 = vrot.slane %v711, 2
        %v713 = vadd.f32 %v711, %v712
        %v714 = vrot.slane %v713, 1
        %v715 = vadd.f32 %v713, %v714
        %v716 = vsel %vm260, %v660, 0.0
        %v717 = vsel %vm260, %v662, 0.0
        %v718 = vadd.f32 %v716, %v717
        %v719 = vrot.slane %v718, 4
        %v720 = vadd.f32 %v718, %v719
        %v721 = vrot.slane %v720, 2
        %v722 = vadd.f32 %v720, %v721
        %v723 = vrot.slane %v722, 1
        %v724 = vadd.f32 %v722, %v723
        %v725 = vsel %vm260, %v664, 0.0
        %v726 = vsel %vm260, %v666, 0.0
        %v727 = vadd.f32 %v725, %v726
        %v728 = vrot.slane %v727, 4
        %v729 = vadd.f32 %v727, %v728
        %v730 = vrot.slane %v729, 2
        %v731 = vadd.f32 %v729, %v730
        %v732 = vrot.slane %v731, 1
        %v733 = vadd.f32 %v731, %v732
        %v734 = vsel %vm260, %v668, 0.0
        %v735 = vsel %vm260, %v670, 0.0
        %v736 = vadd.f32 %v734, %v735
        %v737 = vrot.slane %v736, 4
        %v738 = vadd.f32 %v736, %v737
        %v739 = vrot.slane %v738, 2
        %v740 = vadd.f32 %v738, %v739
        %v741 = vrot.slane %v740, 1
        %v742 = vadd.f32 %v740, %v741
        %v743 = vrcp.pop %v679
        %v744 = vrcp.pop %v688
        %v745 = vrcp.pop %v697
        %v746 = vrcp.pop %v706
        %v747 = vrcp.pop %v715
        %v748 = vrcp.pop %v724
        %v749 = vrcp.pop %v733
        %v750 = vrcp.pop %v742
        %v751 = vmul.f32 %v640, %v743
        %v752 = vmul.f32 %v642, %v743
        %v753 = vmul.f32 %v644, %v744
        %v754 = vmul.f32 %v646, %v744
        %v755 = vmul.f32 %v648, %v745
        %v756 = vmul.f32 %v650, %v745
        %v757 = vmul.f32 %v652, %v746
        %v758 = vmul.f32 %v654, %v746
        %v759 = vmul.f32 %v656, %v747
        %v760 = vmul.f32 %v658, %v747
        %v761 = vmul.f32 %v660, %v748
        %v762 = vmul.f32 %v662, %v748
        %v763 = vmul.f32 %v664, %v749
        %v764 = vmul.f32 %v666, %v749
        %v765 = vmul.f32 %v668, %v750
        %v766 = vmul.f32 %v670, %v750
        %v767 = vcombine.low %v751, %v755
        %v768 = vcombine.high %v751, %v755
        %v770 = vunpack.c.l.s4 1983009808
        %v771 = vunpack.c.0.s8 %v770
        %v772 = vlaneseq
        %v773 = vshrl.u32 %v772, 7
        %v774 = vsub.s32 %v771, %v773
        %v775 = vrot.slane %v767, %v774
        %v777 = vunpack.c.l.s4 1983009808
        %v778 = vunpack.c.0.s8 %v777
        %v779 = vlaneseq
        %v780 = vshrl.u32 %v779, 7
        %v781 = vsub.s32 %v778, %v780
        %v782 = vrot.slane %v768, %v781
        %v783 = vcombine.low %v753, %v757
        %v784 = vcombine.high %v753, %v757
        %v786 = vunpack.c.l.s4 1983009808
        %v787 = vunpack.c.0.s8 %v786
        %v788 = vlaneseq
        %v789 = vshrl.u32 %v788, 7
        %v790 = vsub.s32 %v787, %v789
        %v791 = vrot.slane %v783, %v790
        %v793 = vunpack.c.l.s4 1983009808
        %v794 = vunpack.c.0.s8 %v793
        %v795 = vlaneseq
        %v796 = vshrl.u32 %v795, 7
        %v797 = vsub.s32 %v794, %v796
        %v798 = vrot.slane %v784, %v797
        %v799 = vcombine.low %v759, %v763
        %v800 = vcombine.high %v759, %v763
        %v802 = vunpack.c.l.s4 1983009808
        %v803 = vunpack.c.0.s8 %v802
        %v804 = vlaneseq
        %v805 = vshrl.u32 %v804, 7
        %v806 = vsub.s32 %v803, %v805
        %v807 = vrot.slane %v799, %v806
        %v809 = vunpack.c.l.s4 1983009808
        %v810 = vunpack.c.0.s8 %v809
        %v811 = vlaneseq
        %v812 = vshrl.u32 %v811, 7
        %v813 = vsub.s32 %v810, %v812
        %v814 = vrot.slane %v800, %v813
        %v815 = vcombine.low %v761, %v765
        %v816 = vcombine.high %v761, %v765
        %v818 = vunpack.c.l.s4 1983009808
        %v819 = vunpack.c.0.s8 %v818
        %v820 = vlaneseq
        %v821 = vshrl.u32 %v820, 7
        %v822 = vsub.s32 %v819, %v821
        %v823 = vrot.slane %v815, %v822
        %v825 = vunpack.c.l.s4 1983009808
        %v826 = vunpack.c.0.s8 %v825
        %v827 = vlaneseq
        %v828 = vshrl.u32 %v827, 7
        %v829 = vsub.s32 %v826, %v828
        %v830 = vrot.slane %v816, %v829
        %v831 = vcombine.low %v775, %v791
        %v832 = vcombine.high %v775, %v791
        %v834 = vunpack.c.l.s4 1934713408
        %v835 = vunpack.c.0.s8 %v834
        %v836 = vlaneseq
        %v837 = vshrl.u32 %v836, 7
        %v838 = vsub.s32 %v835, %v837
        %v839 = vrot.slane %v831, %v838
        %v841 = vunpack.c.l.s4 1934713408
        %v842 = vunpack.c.0.s8 %v841
        %v843 = vlaneseq
        %v844 = vshrl.u32 %v843, 7
        %v845 = vsub.s32 %v842, %v844
        %v846 = vrot.slane %v832, %v845
        %v847 = vcombine.low %v782, %v798
        %v848 = vcombine.high %v782, %v798
        %v850 = vunpack.c.l.s4 1934713408
        %v851 = vunpack.c.0.s8 %v850
        %v852 = vlaneseq
        %v853 = vshrl.u32 %v852, 7
        %v854 = vsub.s32 %v851, %v853
        %v855 = vrot.slane %v847, %v854
        %v857 = vunpack.c.l.s4 1934713408
        %v858 = vunpack.c.0.s8 %v857
        %v859 = vlaneseq
        %v860 = vshrl.u32 %v859, 7
        %v861 = vsub.s32 %v858, %v860
        %v862 = vrot.slane %v848, %v861
        %v863 = vcombine.low %v807, %v823
        %v864 = vcombine.high %v807, %v823
        %v866 = vunpack.c.l.s4 1934713408
        %v867 = vunpack.c.0.s8 %v866
        %v868 = vlaneseq
        %v869 = vshrl.u32 %v868, 7
        %v870 = vsub.s32 %v867, %v869
        %v871 = vrot.slane %v863, %v870
        %v873 = vunpack.c.l.s4 1934713408
        %v874 = vunpack.c.0.s8 %v873
        %v875 = vlaneseq
        %v876 = vshrl.u32 %v875, 7
        %v877 = vsub.s32 %v874, %v876
        %v878 = vrot.slane %v864, %v877
        %v879 = vcombine.low %v814, %v830
        %v880 = vcombine.high %v814, %v830
        %v882 = vunpack.c.l.s4 1934713408
        %v883 = vunpack.c.0.s8 %v882
        %v884 = vlaneseq
        %v885 = vshrl.u32 %v884, 7
        %v886 = vsub.s32 %v883, %v885
        %v887 = vrot.slane %v879, %v886
        %v889 = vunpack.c.l.s4 1934713408
        %v890 = vunpack.c.0.s8 %v889
        %v891 = vlaneseq
        %v892 = vshrl.u32 %v891, 7
        %v893 = vsub.s32 %v890, %v892
        %v894 = vrot.slane %v880, %v893
        %v895 = vcombine.low %v839, %v871
        %v896 = vcombine.high %v839, %v871
        %v897 = vcombine.low %v846, %v878
        %v898 = vcombine.high %v846, %v878
        %v899 = vcombine.low %v855, %v887
        %v900 = vcombine.high %v855, %v887
        %v901 = vcombine.low %v862, %v894
        %v902 = vcombine.high %v862, %v894
        %v903 = vcombine.low %v752, %v756
        %v904 = vcombine.high %v752, %v756
        %v906 = vunpack.c.l.s4 1983009808
        %v907 = vunpack.c.0.s8 %v906
        %v908 = vlaneseq
        %v909 = vshrl.u32 %v908, 7
        %v910 = vsub.s32 %v907, %v909
        %v911 = vrot.slane %v903, %v910
        %v913 = vunpack.c.l.s4 1983009808
        %v914 = vunpack.c.0.s8 %v913
        %v915 = vlaneseq
        %v916 = vshrl.u32 %v915, 7
        %v917 = vsub.s32 %v914, %v916
        %v918 = vrot.slane %v904, %v917
        %v919 = vcombine.low %v754, %v758
        %v920 = vcombine.high %v754, %v758
        %v922 = vunpack.c.l.s4 1983009808
        %v923 = vunpack.c.0.s8 %v922
        %v924 = vlaneseq
        %v925 = vshrl.u32 %v924, 7
        %v926 = vsub.s32 %v923, %v925
        %v927 = vrot.slane %v919, %v926
        %v929 = vunpack.c.l.s4 1983009808
        %v930 = vunpack.c.0.s8 %v929
        %v931 = vlaneseq
        %v932 = vshrl.u32 %v931, 7
        %v933 = vsub.s32 %v930, %v932
        %v934 = vrot.slane %v920, %v933
        %v935 = vcombine.low %v760, %v764
        %v936 = vcombine.high %v760, %v764
        %v938 = vunpack.c.l.s4 1983009808
        %v939 = vunpack.c.0.s8 %v938
        %v940 = vlaneseq
        %v941 = vshrl.u32 %v940, 7
        %v942 = vsub.s32 %v939, %v941
        %v943 = vrot.slane %v935, %v942
        %v945 = vunpack.c.l.s4 1983009808
        %v946 = vunpack.c.0.s8 %v945
        %v947 = vlaneseq
        %v948 = vshrl.u32 %v947, 7
        %v949 = vsub.s32 %v946, %v948
        %v950 = vrot.slane %v936, %v949
        %v951 = vcombine.low %v762, %v766
        %v952 = vcombine.high %v762, %v766
        %v954 = vunpack.c.l.s4 1983009808
        %v955 = vunpack.c.0.s8 %v954
        %v956 = vlaneseq
        %v957 = vshrl.u32 %v956, 7
        %v958 = vsub.s32 %v955, %v957
        %v959 = vrot.slane %v951, %v958
        %v961 = vunpack.c.l.s4 1983009808
        %v962 = vunpack.c.0.s8 %v961
        %v963 = vlaneseq
        %v964 = vshrl.u32 %v963, 7
        %v965 = vsub.s32 %v962, %v964
        %v966 = vrot.slane %v952, %v965
        %v967 = vcombine.low %v911, %v927
        %v968 = vcombine.high %v911, %v927
        %v970 = vunpack.c.l.s4 1934713408
        %v971 = vunpack.c.0.s8 %v970
        %v972 = vlaneseq
        %v973 = vshrl.u32 %v972, 7
        %v974 = vsub.s32 %v971, %v973
        %v975 = vrot.slane %v967, %v974
        %v977 = vunpack.c.l.s4 1934713408
        %v978 = vunpack.c.0.s8 %v977
        %v979 = vlaneseq
        %v980 = vshrl.u32 %v979, 7
        %v981 = vsub.s32 %v978, %v980
        %v982 = vrot.slane %v968, %v981
        %v983 = vcombine.low %v918, %v934
        %v984 = vcombine.high %v918, %v934
        %v986 = vunpack.c.l.s4 1934713408
        %v987 = vunpack.c.0.s8 %v986
        %v988 = vlaneseq
        %v989 = vshrl.u32 %v988, 7
        %v990 = vsub.s32 %v987, %v989
        %v991 = vrot.slane %v983, %v990
        %v993 = vunpack.c.l.s4 1934713408
        %v994 = vunpack.c.0.s8 %v993
        %v995 = vlaneseq
        %v996 = vshrl.u32 %v995, 7
        %v997 = vsub.s32 %v994, %v996
        %v998 = vrot.slane %v984, %v997
        %v999 = vcombine.low %v943, %v959
        %v1000 = vcombine.high %v943, %v959
        %v1002 = vunpack.c.l.s4 1934713408
        %v1003 = vunpack.c.0.s8 %v1002
        %v1004 = vlaneseq
        %v1005 = vshrl.u32 %v1004, 7
        %v1006 = vsub.s32 %v1003, %v1005
        %v1007 = vrot.slane %v999, %v1006
        %v1009 = vunpack.c.l.s4 1934713408
        %v1010 = vunpack.c.0.s8 %v1009
        %v1011 = vlaneseq
        %v1012 = vshrl.u32 %v1011, 7
        %v1013 = vsub.s32 %v1010, %v1012
        %v1014 = vrot.slane %v1000, %v1013
        %v1015 = vcombine.low %v950, %v966
        %v1016 = vcombine.high %v950, %v966
        %v1018 = vunpack.c.l.s4 1934713408
        %v1019 = vunpack.c.0.s8 %v1018
        %v1020 = vlaneseq
        %v1021 = vshrl.u32 %v1020, 7
        %v1022 = vsub.s32 %v1019, %v1021
        %v1023 = vrot.slane %v1015, %v1022
        %v1025 = vunpack.c.l.s4 1934713408
        %v1026 = vunpack.c.0.s8 %v1025
        %v1027 = vlaneseq
        %v1028 = vshrl.u32 %v1027, 7
        %v1029 = vsub.s32 %v1026, %v1028
        %v1030 = vrot.slane %v1016, %v1029
        %v1031 = vcombine.low %v975, %v1007
        %v1032 = vcombine.high %v975, %v1007
        %v1033 = vcombine.low %v982, %v1014
        %v1034 = vcombine.high %v982, %v1014
        %v1035 = vcombine.low %v991, %v1023
        %v1036 = vcombine.high %v991, %v1023
        %v1037 = vcombine.low %v998, %v1030
        %v1038 = vcombine.high %v998, %v1030
        %1040 = vrot.lane.b32.xlu0 %v896, 32
        %v1041 = vpop.permute.xlu0 %1040
        %1044 = vrot.lane.b32.xlu0 %v897, 64
        %v1045 = vpop.permute.xlu0 %1044
        %1048 = vrot.lane.b32.xlu0 %v898, 96
        %v1049 = vpop.permute.xlu0 %1048
        %1052 = vrot.lane.b32.xlu0 %v900, 32
        %v1053 = vpop.permute.xlu0 %1052
        %1056 = vrot.lane.b32.xlu0 %v901, 64
        %v1057 = vpop.permute.xlu0 %1056
        %1060 = vrot.lane.b32.xlu0 %v902, 96
        %v1061 = vpop.permute.xlu0 %1060
        %1064 = vrot.lane.b32.xlu0 %v1032, 32
        %v1065 = vpop.permute.xlu0 %1064
        %1068 = vrot.lane.b32.xlu0 %v1033, 64
        %v1069 = vpop.permute.xlu0 %1068
        %1072 = vrot.lane.b32.xlu0 %v1034, 96
        %v1073 = vpop.permute.xlu0 %1072
        %1076 = vrot.lane.b32.xlu0 %v1036, 32
        %v1077 = vpop.permute.xlu0 %1076
        %1080 = vrot.lane.b32.xlu0 %v1037, 64
        %v1081 = vpop.permute.xlu0 %1080
        %1084 = vrot.lane.b32.xlu0 %v1038, 96
        %v1085 = vpop.permute.xlu0 %1084
        %v1087 = vsel %vm260, %v895, %v1041
        %vm1088 = vcmask 523264
        %v1089 = vsel %vm1088, %v1087, %v1045
        %vm1090 = vcmask 785408
        %v1091 = vsel %vm1090, %v1089, %v1049
        %v1092 = vsel %vm260, %v899, %v1053
        %v1093 = vsel %vm1088, %v1092, %v1057
        %v1094 = vsel %vm1090, %v1093, %v1061
        %v1095 = vsel %vm260, %v1031, %v1065
        %v1096 = vsel %vm1088, %v1095, %v1069
        %v1097 = vsel %vm1090, %v1096, %v1073
        %v1098 = vsel %vm260, %v1035, %v1077
        %v1099 = vsel %vm1088, %v1098, %v1081
        %v1100 = vsel %vm1090, %v1099, %v1085
        %v1101 = vpack.c.bf16 %v1091, %v1091
        %v1102 = vpack.c.bf16 %v1094, %v1094
        %v1103 = vpack.c.bf16 %v1097, %v1097
        %v1104 = vpack.c.bf16 %v1100, %v1100
        %v1109 = vunpack.c.l.b16 %v1101
        %v1110 = vunpack.c.l.b16 %v1102
        %v1111 = vunpack.c.l.b16 %v1103
        %v1112 = vunpack.c.l.b16 %v1104
        %v1113 = vpack.c.b16 %v1110, %v1109
        %v1114 = vpack.c.b16 %v1112, %v1111
        %1117 = vst [vmem:[%s246] sm:$0xff] %v1113
        %1118 = vst [vmem:[%s246 + $0x8] sm:$0xff] %v1114
        %s1119 = sand.u32 %s134, 1
        %s1120 = scalar_lea.sflag [#allocation4], %s1119
        %s1121 = sand.u32 %s134, 1
        %s1122 = smul.addr %s1121, 16
        %s1123 = scalar_lea.vmem [#allocation8], %s1122
        // Predicated region
        $region53: #{tpu_custom_call.1} parent=39 // pred_check
          %p1124 = pneg %p144
        $region54: #{tpu_custom_call.1} parent=39 // pred_check_branch
          %1126 = sbr.rel (%p1124) target = $region56
        $region55: #{tpu_custom_call.1} parent=39 // pred_region
          %s1128 = ssub.s32 256, 256
          %1129 = vsyncadd %s1120, %s1128
          %s1130 = smul.addr %s21, 4
          %s1131 = smul.addr %s1130, 64
          %s1132 = scalar_lea.hbm %s5, %s1131
          %s1134 = sshll.u32 %s1123, 4
          %s1135 = int_to_ptr.vmem [resolvable:$true] %s1134
          %1137 = dma.vmem_to_hbm [thread:$0]  %s1135, 256, %s1132, %s1120
        $region56: #{tpu_custom_call.1} parent=39 // pred_fallthru
          _
      $region40: #{tpu_custom_call.1} parent=5 // pred_fallthru
        _
      %p1138 = scmp.le.s32.totalorder 2, %s16
      // Predicated region
      $region57: #{tpu_custom_call.1} parent=5 // pred_check
        %p1139 = pneg %p1138
      $region58: #{tpu_custom_call.1} parent=5 // pred_check_branch
        %1141 = sbr.rel (%p1139) target = $region60
      $region59: #{tpu_custom_call.1} parent=5 // pred_region
        %s1142 = ssub.s32 %s16, 2
        // Predicated region
        $region61: #{tpu_custom_call.1} parent=59 // pred_check
          %p1143 = pneg %p150
        $region62: #{tpu_custom_call.1} parent=59 // pred_check_branch
          %1145 = sbr.rel (%p1143) target = $region64
        $region63: #{tpu_custom_call.1} parent=59 // pred_region
          %s1146 = sand.u32 %s135, 1
          %s1147 = scalar_lea.sflag [#allocation4], %s1146
          %s1148 = sand.u32 %s135, 1
          %s1149 = smul.addr %s1148, 16
          %s1150 = scalar_lea.vmem [#allocation8], %s1149
          %1151 = dma.done %s1147, 256
        $region64: #{tpu_custom_call.1} parent=59 // pred_fallthru
          _
      $region60: #{tpu_custom_call.1} parent=5 // pred_fallthru
        _
    $region6: #{tpu_custom_call.1} parent=1 // loop_footer
      %s20 = sadd.s32 1, %s16
    $region7: #{tpu_custom_call.1} parent=1 // loop_footer_branch
      %15 = sbr.rel target = $region3
    $region8: #{tpu_custom_call.1} parent=1 // loop_exit
      _
    %1152 = vsyncpa [#allocation3], 1
    %s1153 = scalar_lea.sflag [#allocation3], 1
    %1154 = vsyncpa %s1153, 1
    %1155 = vsyncpa [#allocation6], 1
    %1156 = vsyncpa [#allocation4], 1
    %s1157 = scalar_lea.sflag [#allocation4], 1
    %1158 = vsyncpa %s1157, 1

</llo_original>
